<compile_context>
chip_gen: v7x
topology: tpu7x:2x2x1
jax: 0.10.0
libtpu: 0.0.40
codegen_flags: <defaults>
</compile_context>

<pallas_src>
import functools

import jax
import jax.numpy as jnp
from jax.experimental import pallas as pl
from jax.experimental.pallas import tpu as pltpu


def _causal_conv_kernel(x_ref, w_ref, b_ref, o_ref, win_ref,
                        *, kernel_size, dilation, pad, t_tile):
    """One (b, t) tile of the causal dilated conv.

    x_ref:   (1, t_tile, Cin)          current input tile (channel-last)
    w_ref:   (K, Cin, Cout_p)          per-tap weights, Cout padded to 128 lanes
    b_ref:   (1, Cout_p)               padded bias
    o_ref:   (1, t_tile, Cout_p)       output tile (lane-dense)
    win_ref: (t_tile + pad, Cin) VMEM  sliding window; rows [0, pad) are the
                                       causal halo carried across T tiles.
    """
    cin = x_ref.shape[-1]
    x_tile = x_ref[0]                                    # (t_tile, Cin)

    if pad > 0:
        # Causal left padding: zero the halo at the start of each batch row.
        @pl.when(pl.program_id(1) == 0)
        def _():
            win_ref[0:pad, :] = jnp.zeros((pad, cin), jnp.float32)

        # Stage the current tile behind the halo and read the full window.
        win_ref[pad:, :] = x_tile
        win = win_ref[...]                               # (t_tile + pad, Cin)
    else:
        win = x_tile                                     # K == 1: no halo

    cout_p = o_ref.shape[-1]
    acc = jnp.zeros((t_tile, cout_p), jnp.float32)
    for k in range(kernel_size):                         # static unrolled taps
        off = k * dilation
        acc = acc + jnp.dot(win[off:off + t_tile, :], w_ref[k],
                            preferred_element_type=jnp.float32)

    o_ref[0] = (acc + b_ref[...]).astype(o_ref.dtype)

    if pad > 0:
        # Carry the last `pad` rows of this window into the next T tile.
        win_ref[0:pad, :] = win[t_tile:, :]


def causal1d_conv(x_nct, weight, bias, *, dilation, t_tile=None):
    """Pallas implementation of Causal1DConv.forward.

    x_nct:  (B, Cin, T)   -- same layout as the PyTorch module's input
    weight: (Cout, Cin, K) -- nn.Conv1d weight layout
    bias:   (Cout,)
    returns (B, Cout, T)
    """
    B, Cin, T = x_nct.shape
    Cout, Cin_w, K = weight.shape
    assert Cin_w == Cin
    pad = (K - 1) * dilation

    LANES = 128
    Cout_p = ((Cout + LANES - 1) // LANES) * LANES

    if t_tile is None:
        t_tile = T
        for cand in (512, 256, 128, 64, 32, 16, 8):
            if T % cand == 0:
                t_tile = cand
                break
    assert T % t_tile == 0
    assert (t_tile % 8 == 0) or (t_tile == T)

    # One-time layout prep (the "permute weights offline" equivalent):
    #   x: NCT -> NLC so channels ride the lanes inside the kernel.
    #   w: (Cout, Cin, K) -> (K, Cin, Cout) and pad Cout to 128 lanes.
    x_nlc = jnp.transpose(x_nct, (0, 2, 1))
    w_kio = jnp.transpose(weight, (2, 1, 0))
    w_kio = jnp.pad(w_kio, ((0, 0), (0, 0), (0, Cout_p - Cout)))
    b_p = jnp.pad(bias, (0, Cout_p - Cout)).reshape(1, Cout_p)

    kern = functools.partial(_causal_conv_kernel, kernel_size=K,
                             dilation=dilation, pad=pad, t_tile=t_tile)

    out_nlc = pl.pallas_call(
        kern,
        out_shape=jax.ShapeDtypeStruct((B, T, Cout_p), jnp.float32),
        grid=(B, T // t_tile),
        in_specs=[
            pl.BlockSpec((1, t_tile, Cin), lambda b, t: (b, t, 0)),
            pl.BlockSpec((K, Cin, Cout_p), lambda b, t: (0, 0, 0)),
            pl.BlockSpec((1, Cout_p), lambda b, t: (0, 0)),
        ],
        out_specs=pl.BlockSpec((1, t_tile, Cout_p), lambda b, t: (b, t, 0)),
        scratch_shapes=[pltpu.VMEM((t_tile + pad, Cin), jnp.float32)],
        compiler_params=pltpu.CompilerParams(
            dimension_semantics=("parallel", "arbitrary")),
    )(x_nlc, w_kio, b_p)

    # Back to the PyTorch contract: strip lane padding, NLC -> NCT.
    return jnp.transpose(out_nlc[:, :, :Cout], (0, 2, 1))


if __name__ == "__main__":
    # Small shapes consistent with the module: batch=2, channels=4, length=16.
    B, Cin, Cout, T = 2, 4, 32, 16
    K, dilation = 3, 2
    pad = (K - 1) * dilation

    key = jax.random.PRNGKey(0)
    kx, kw, kb = jax.random.split(key, 3)
    x = jax.random.normal(kx, (B, Cin, T), jnp.float32)
    bound = 1.0 / (Cin * K) ** 0.5
    w = jax.random.uniform(kw, (Cout, Cin, K), jnp.float32, -bound, bound)
    b = jax.random.uniform(kb, (Cout,), jnp.float32, -bound, bound)

    # t_tile=8 exercises the multi-tile halo carry on the 16-step sequence.
    fwd = jax.jit(functools.partial(causal1d_conv, dilation=dilation, t_tile=8))
    out = fwd(x, w, b)
    jax.block_until_ready(out)

    # Pure-JAX reference: left-only padding == pad-both-sides + right chomp.
    ref = jax.lax.conv_general_dilated(
        x, w, window_strides=(1,), padding=[(pad, 0)],
        rhs_dilation=(dilation,),
        dimension_numbers=("NCH", "OIH", "NCH"),
    ) + b[None, :, None]

    assert out.shape == (B, Cout, T)
    err = float(jnp.max(jnp.abs(out - ref)))
    assert jnp.allclose(out, ref, atol=1e-4, rtol=1e-4), err
    assert bool(jnp.all(jnp.isfinite(out)))
    print("KERNEL_OK")
</pallas_src>

<mosaic_0001>
module attributes {stable_mosaic.version = 11 : i64} {
  func.func @_causal_conv_kernel(%arg0: i32, %arg1: i32, %arg2: memref<1x8x4xf32, #tpu.memory_space<vmem>>, %arg3: memref<3x4x128xf32, #tpu.memory_space<vmem>>, %arg4: memref<1x128xf32, #tpu.memory_space<vmem>>, %arg5: memref<1x8x128xf32, #tpu.memory_space<vmem>>, %arg6: memref<12x4xf32, #tpu.memory_space<vmem>>) attributes {dimension_semantics = [#tpu.dimension_semantics<parallel>, #tpu.dimension_semantics<arbitrary>], iteration_bounds = array<i64: 2, 2>, scalar_prefetch = 0 : i64, scratch_operands = 1 : i64, tpu.core_type = #tpu.core_type<tc>, window_params = [{transform_indices = @transform_0, window_bounds = array<i64: 1, 8, 4>}, {pipeline_mode = #tpu.pipeline_mode<synchronous>, transform_indices = @transform_1, window_bounds = array<i64: 3, 4, 128>}, {pipeline_mode = #tpu.pipeline_mode<synchronous>, transform_indices = @transform_2, window_bounds = array<i64: 1, 128>}, {transform_indices = @transform_3, window_bounds = array<i64: 1, 8, 128>}]} {
    %c0 = arith.constant 0 : index
    %c0_0 = arith.constant 0 : index
    %c0_1 = arith.constant 0 : index
    %0 = vector.load %arg2[%c0, %c0_0, %c0_1] : memref<1x8x4xf32, #tpu.memory_space<vmem>>, vector<1x8x4xf32>
    %1 = vector.shape_cast %0 : vector<1x8x4xf32> to vector<8x4xf32>
    %c0_i32 = arith.constant 0 : i32
    %2 = arith.cmpi eq, %arg1, %c0_i32 : i32
    %3 = arith.extui %2 : i1 to i32
    %c0_i32_2 = arith.constant 0 : i32
    %4 = arith.cmpi ne, %3, %c0_i32_2 : i32
    scf.if %4 {
      %cst_23 = arith.constant 0.000000e+00 : f32
      %31 = vector.broadcast %cst_23 : f32 to vector<4x4xf32>
      %c0_24 = arith.constant 0 : index
      %c0_25 = arith.constant 0 : index
      %32 = vector.load %arg6[%c0_24, %c0_25] : memref<12x4xf32, #tpu.memory_space<vmem>>, vector<4x4xf32>
      tpu.vector_store %arg6[%c0_24, %c0_25], %31 {strides = array<i32>} : memref<12x4xf32, #tpu.memory_space<vmem>>, vector<4x4xf32>,
    } else {
    }
    %c4 = arith.constant 4 : index
    %c0_3 = arith.constant 0 : index
    %5 = vector.load %arg6[%c4, %c0_3] : memref<12x4xf32, #tpu.memory_space<vmem>>, vector<8x4xf32>
    tpu.vector_store %arg6[%c4, %c0_3], %1 {strides = array<i32>} : memref<12x4xf32, #tpu.memory_space<vmem>>, vector<8x4xf32>,
    %c0_4 = arith.constant 0 : index
    %c0_5 = arith.constant 0 : index
    %6 = vector.load %arg6[%c0_4, %c0_5] : memref<12x4xf32, #tpu.memory_space<vmem>>, vector<12x4xf32>
    %cst = arith.constant 0.000000e+00 : f32
    %7 = vector.broadcast %cst : f32 to vector<8x128xf32>
    %8 = vector.extract_strided_slice %6 {offsets = [0, 0], sizes = [8, 4], strides = [1, 1]} : vector<12x4xf32> to vector<8x4xf32>
    %c0_6 = arith.constant 0 : index
    %c0_7 = arith.constant 0 : index
    %c0_8 = arith.constant 0 : index
    %9 = vector.load %arg3[%c0_6, %c0_7, %c0_8] : memref<3x4x128xf32, #tpu.memory_space<vmem>>, vector<1x4x128xf32>
    %10 = vector.shape_cast %9 : vector<1x4x128xf32> to vector<4x128xf32>
    %cst_9 = arith.constant dense<0.000000e+00> : vector<8x128xf32>
    %11 = tpu.matmul %8, %10, %cst_9 {dimension_numbers = #tpu.dot_dimension_numbers<[1], [0], [0], [1], [0, 0, 1, 1], [], []>} : vector<8x4xf32>, vector<4x128xf32>, vector<8x128xf32> -> vector<8x128xf32>
    %12 = arith.addf %7, %11 : vector<8x128xf32>
    %13 = vector.extract_strided_slice %6 {offsets = [2, 0], sizes = [8, 4], strides = [1, 1]} : vector<12x4xf32> to vector<8x4xf32>
    %c1 = arith.constant 1 : index
    %c0_10 = arith.constant 0 : index
    %c0_11 = arith.constant 0 : index
    %14 = vector.load %arg3[%c1, %c0_10, %c0_11] : memref<3x4x128xf32, #tpu.memory_space<vmem>>, vector<1x4x128xf32>
    %15 = vector.shape_cast %14 : vector<1x4x128xf32> to vector<4x128xf32>
    %cst_12 = arith.constant dense<0.000000e+00> : vector<8x128xf32>
    %16 = tpu.matmul %13, %15, %cst_12 {dimension_numbers = #tpu.dot_dimension_numbers<[1], [0], [0], [1], [0, 0, 1, 1], [], []>} : vector<8x4xf32>, vector<4x128xf32>, vector<8x128xf32> -> vector<8x128xf32>
    %17 = arith.addf %12, %16 : vector<8x128xf32>
    %18 = vector.extract_strided_slice %6 {offsets = [4, 0], sizes = [8, 4], strides = [1, 1]} : vector<12x4xf32> to vector<8x4xf32>
    %c2 = arith.constant 2 : index
    %c0_13 = arith.constant 0 : index
    %c0_14 = arith.constant 0 : index
    %19 = vector.load %arg3[%c2, %c0_13, %c0_14] : memref<3x4x128xf32, #tpu.memory_space<vmem>>, vector<1x4x128xf32>
    %20 = vector.shape_cast %19 : vector<1x4x128xf32> to vector<4x128xf32>
    %cst_15 = arith.constant dense<0.000000e+00> : vector<8x128xf32>
    %21 = tpu.matmul %18, %20, %cst_15 {dimension_numbers = #tpu.dot_dimension_numbers<[1], [0], [0], [1], [0, 0, 1, 1], [], []>} : vector<8x4xf32>, vector<4x128xf32>, vector<8x128xf32> -> vector<8x128xf32>
    %22 = arith.addf %17, %21 : vector<8x128xf32>
    %c0_16 = arith.constant 0 : index
    %c0_17 = arith.constant 0 : index
    %23 = vector.load %arg4[%c0_16, %c0_17] : memref<1x128xf32, #tpu.memory_space<vmem>>, vector<1x128xf32>
    %24 = vector.broadcast %23 : vector<1x128xf32> to vector<8x128xf32>
    %25 = arith.addf %22, %24 : vector<8x128xf32>
    %c0_18 = arith.constant 0 : index
    %c0_19 = arith.constant 0 : index
    %c0_20 = arith.constant 0 : index
    %26 = vector.load %arg5[%c0_18, %c0_19, %c0_20] : memref<1x8x128xf32, #tpu.memory_space<vmem>>, vector<1x8x128xf32>
    %27 = vector.shape_cast %26 : vector<1x8x128xf32> to vector<8x128xf32>
    %28 = vector.shape_cast %25 : vector<8x128xf32> to vector<1x8x128xf32>
    tpu.vector_store %arg5[%c0_18, %c0_19, %c0_20], %28 {strides = array<i32>} : memref<1x8x128xf32, #tpu.memory_space<vmem>>, vector<1x8x128xf32>,
    %29 = vector.extract_strided_slice %6 {offsets = [8, 0], sizes = [4, 4], strides = [1, 1]} : vector<12x4xf32> to vector<4x4xf32>
    %c0_21 = arith.constant 0 : index
    %c0_22 = arith.constant 0 : index
    %30 = vector.load %arg6[%c0_21, %c0_22] : memref<12x4xf32, #tpu.memory_space<vmem>>, vector<4x4xf32>
    tpu.vector_store %arg6[%c0_21, %c0_22], %29 {strides = array<i32>} : memref<12x4xf32, #tpu.memory_space<vmem>>, vector<4x4xf32>,
    return
  }
  func.func @transform_0(%arg0: i32, %arg1: i32) -> (i32, i32, i32) {
    %c0_i32 = arith.constant 0 : i32
    %c0_i32_0 = arith.constant 0 : i32
    return %arg0, %arg1, %c0_i32 : i32, i32, i32
  }
  func.func @transform_1(%arg0: i32, %arg1: i32) -> (i32, i32, i32) {
    %c0_i32 = arith.constant 0 : i32
    %c0_i32_0 = arith.constant 0 : i32
    %c0_i32_1 = arith.constant 0 : i32
    %c0_i32_2 = arith.constant 0 : i32
    return %c0_i32, %c0_i32_0, %c0_i32_1 : i32, i32, i32
  }
  func.func @transform_2(%arg0: i32, %arg1: i32) -> (i32, i32) {
    %c0_i32 = arith.constant 0 : i32
    %c0_i32_0 = arith.constant 0 : i32
    %c0_i32_1 = arith.constant 0 : i32
    return %c0_i32, %c0_i32_0 : i32, i32
  }
  func.func @transform_3(%arg0: i32, %arg1: i32) -> (i32, i32, i32) {
    %c0_i32 = arith.constant 0 : i32
    %c0_i32_0 = arith.constant 0 : i32
    return %arg0, %arg1, %c0_i32 : i32, i32, i32
  }
}

</mosaic_0001>

<llo_original>
// kernel: causal1d_conv.1
$region0: #{causal1d_conv.1}
  #allocation0 [shape = 'u32[]', space=smem, size = 0x4, offset = 0x4, fixed_abs, tag = 'smem constant byte address 0x4 - core index']
  #allocation1 [shape = 'u32[144,128]{1,0:T(1,128)}', space=vmem, size = 0x12000, scoped, tag = 'internal scratch']
  #allocation2 [shape = 'f32[12,4]{1,0:T(8,128)}', space=vmem, size = 0x2000, scoped, tag = 'scratch operand']
  %s0 = inlined_call_operand.vmem [shape: f32[2,16,4], index: 0, kind: input, shape index: {}]
  %s1 = inlined_call_operand.vmem [shape: f32[3,4,128], index: 1, kind: input, shape index: {}]
  %s2 = inlined_call_operand.vmem [shape: f32[1,128], index: 2, kind: input, shape index: {}]
  %s3 = inlined_call_operand.vmem [shape: f32[2,16,128], index: 3, kind: output, shape index: {}]
  %s4 = sld [smem:[#allocation0]]
  $region49: #{causal1d_conv.1} parent=0
    _
  %s6 = ssub.s32 1, %s4
  %s7 = scalar_select 0, %s6, %s4
  loop: start=0, step=1, limit=6
  $region2: #{causal1d_conv.1} parent=0 // loop_pre_header
    _
  $region3: #{causal1d_conv.1} parent=0 // loop_header
    %s9 = sphi 0, %s13
    %p10 = scmp.ge.s32.totalorder %s9, 6
    %s16 = sphi 0, %s28
    %s17 = sphi 0, %s24
    %s18 = sphi 0, %s16
    %s19 = sphi 0, %s17
    %s20 = sphi 0, %s18
    %s21 = sphi 0, %s19
    %s33 = sphi 0, %s35
    %s36 = sphi 0, %s33
    %s37 = sphi 0, %s36
    %s53 = sphi 0, %s37
    %s57 = sphi 0, %s57
    %s59 = sphi 0, %s57
    %s60 = sphi 0, %s59
    %s74 = sphi 0, %s60
    %s78 = sphi 0, %s78
    %s80 = sphi 0, %s78
    %s81 = sphi 0, %s80
    %s95 = sphi 0, %s81
    %s103 = sphi 0, %s105
    %s106 = sphi 0, %s103
    %s107 = sphi 0, %s106
    %s123 = sphi 0, %s107
  $region4: #{causal1d_conv.1} parent=0 // loop_header_branch
    %12 = sbr.rel (%p10) target = $region8
  $region5: #{causal1d_conv.1} parent=0 // loop_body
    %s14 = ssub.s32 %s9, 1
    %s15 = ssub.s32 %s9, 2
    %s22 = sadd.s32 1, %s17
    %p23 = scmp.ge.s32.totalorder %s22, 2
    %s24 = scalar_select %p23, 0, %s22
    %s25 = sadd.s32 1, %s16
    %s26 = scalar_select %p23, %s25, %s16
    %p27 = scmp.ge.s32.totalorder %s26, 2
    %s28 = scalar_select %p27, 0, %s26
    %s29 = ssub.s32 %s16, %s28
    %s30 = ssub.s32 %s17, %s24
    %s31 = sor.u32 %s29, %s30
    %p32 = scmp.eq.s32.totalorder %s31, 0
    %s34 = sadd.s32 %s33, 1
    %s35 = scalar_select %p32, %s33, %s34
    %p38 = pneg %p32
    %p39 = scmp.eq.s32.totalorder %s9, 3
    %p40 = por %p38, %p39
    %p41 = scmp.ne.s32.totalorder %s33, %s36
    %p42 = scmp.eq.s32.totalorder %s9, 0
    %p43 = por %p41, %p42
    %p44 = scmp.ne.s32.totalorder %s33, %s36
    %p45 = scmp.eq.s32.totalorder %s14, 3
    %p46 = por %p44, %p45
    %p47 = scmp.ne.s32.totalorder %s36, %s37
    %p48 = scmp.eq.s32.totalorder %s14, 0
    %p49 = por %p47, %p48
    %p50 = scmp.ne.s32.totalorder %s36, %s37
    %p51 = scmp.eq.s32.totalorder %s15, 3
    %p52 = por %p50, %p51
    %p54 = scmp.ne.s32.totalorder %s37, %s53
    %p55 = scmp.eq.s32.totalorder %s15, 0
    %p56 = por %p54, %p55
    %s58 = sadd.s32 %s57, 1
    %p61 = scmp.eq.s32.totalorder %s9, 3
    %p62 = scmp.ne.s32.totalorder %s57, %s59
    %p63 = scmp.eq.s32.totalorder %s9, 0
    %p64 = por %p62, %p63
    %p65 = scmp.ne.s32.totalorder %s57, %s59
    %p66 = scmp.eq.s32.totalorder %s14, 3
    %p67 = por %p65, %p66
    %p68 = scmp.ne.s32.totalorder %s59, %s60
    %p69 = scmp.eq.s32.totalorder %s14, 0
    %p70 = por %p68, %p69
    %p71 = scmp.ne.s32.totalorder %s59, %s60
    %p72 = scmp.eq.s32.totalorder %s15, 3
    %p73 = por %p71, %p72
    %p75 = scmp.ne.s32.totalorder %s60, %s74
    %p76 = scmp.eq.s32.totalorder %s15, 0
    %p77 = por %p75, %p76
    %s79 = sadd.s32 %s78, 1
    %p82 = scmp.eq.s32.totalorder %s9, 3
    %p83 = scmp.ne.s32.totalorder %s78, %s80
    %p84 = scmp.eq.s32.totalorder %s9, 0
    %p85 = por %p83, %p84
    %p86 = scmp.ne.s32.totalorder %s78, %s80
    %p87 = scmp.eq.s32.totalorder %s14, 3
    %p88 = por %p86, %p87
    %p89 = scmp.ne.s32.totalorder %s80, %s81
    %p90 = scmp.eq.s32.totalorder %s14, 0
    %p91 = por %p89, %p90
    %p92 = scmp.ne.s32.totalorder %s80, %s81
    %p93 = scmp.eq.s32.totalorder %s15, 3
    %p94 = por %p92, %p93
    %p96 = scmp.ne.s32.totalorder %s81, %s95
    %p97 = scmp.eq.s32.totalorder %s15, 0
    %p98 = por %p96, %p97
    %s99 = ssub.s32 %s16, %s28
    %s100 = ssub.s32 %s17, %s24
    %s101 = sor.u32 %s99, %s100
    %p102 = scmp.eq.s32.totalorder %s101, 0
    %s104 = sadd.s32 %s103, 1
    %s105 = scalar_select %p102, %s103, %s104
    %p108 = pneg %p102
    %p109 = scmp.eq.s32.totalorder %s9, 3
    %p110 = por %p108, %p109
    %p111 = scmp.ne.s32.totalorder %s103, %s106
    %p112 = scmp.eq.s32.totalorder %s9, 0
    %p113 = por %p111, %p112
    %p114 = scmp.ne.s32.totalorder %s103, %s106
    %p115 = scmp.eq.s32.totalorder %s14, 3
    %p116 = por %p114, %p115
    %p117 = scmp.ne.s32.totalorder %s106, %s107
    %p118 = scmp.eq.s32.totalorder %s14, 0
    %p119 = por %p117, %p118
    %p120 = scmp.ne.s32.totalorder %s106, %s107
    %p121 = scmp.eq.s32.totalorder %s15, 3
    %p122 = por %p120, %p121
    %p124 = scmp.ne.s32.totalorder %s107, %s123
    %p125 = scmp.eq.s32.totalorder %s15, 0
    %p126 = por %p124, %p125
    %p127 = scmp.le.s32.totalorder 1, %s9
    %p128 = scmp.lt.s32.totalorder %s9, 5
    %p129 = pnand %p127, %p128
    %p130 = pneg %p129
    // Predicated region
    $region9: #{causal1d_conv.1} parent=5 // pred_check
      _
    $region10: #{causal1d_conv.1} parent=5 // pred_check_branch
      %132 = sbr.rel (%p129) target = $region12
    $region11: #{causal1d_conv.1} parent=5 // pred_region
      %s133 = ssub.s32 %s9, 1
      // Predicated region
      $region13: #{causal1d_conv.1} parent=11 // pred_check
        %p134 = pneg %p70
      $region14: #{causal1d_conv.1} parent=11 // pred_check_branch
        %136 = sbr.rel (%p134) target = $region16
      $region15: #{causal1d_conv.1} parent=11 // pred_region
        _
      $region16: #{causal1d_conv.1} parent=11 // pred_fallthru
        _
      // Predicated region
      $region17: #{causal1d_conv.1} parent=11 // pred_check
        %p137 = pneg %p91
      $region18: #{causal1d_conv.1} parent=11 // pred_check_branch
        %139 = sbr.rel (%p137) target = $region20
      $region19: #{causal1d_conv.1} parent=11 // pred_region
        _
      $region20: #{causal1d_conv.1} parent=11 // pred_fallthru
        _
    $region12: #{causal1d_conv.1} parent=5 // pred_fallthru
      _
    %p140 = scmp.lt.s32.totalorder %s9, 4
    // Predicated region
    $region21: #{causal1d_conv.1} parent=5 // pred_check
      %p141 = pneg %p140
    $region22: #{causal1d_conv.1} parent=5 // pred_check_branch
      %143 = sbr.rel (%p141) target = $region24
    $region23: #{causal1d_conv.1} parent=5 // pred_region
      // Predicated region
      $region25: #{causal1d_conv.1} parent=23 // pred_check
        %p144 = pneg %p43
      $region26: #{causal1d_conv.1} parent=23 // pred_check_branch
        %146 = sbr.rel (%p144) target = $region28
      $region27: #{causal1d_conv.1} parent=23 // pred_region
        %p147 = scmp.lt.s32.totalorder %s16, 1
        %s148 = scalar_select %p147, %s16, 1
        %p149 = scmp.lt.s32.totalorder %s17, 1
        %s150 = scalar_select %p149, %s17, 1
        %s151 = smul.addr %s148, 2
        %s152 = sadd.s32 %s150, %s151
        %s153 = smul.addr %s152, 8
        %s154 = scalar_lea.vmem %s0, %s153
      $region28: #{causal1d_conv.1} parent=23 // pred_fallthru
        _
    $region24: #{causal1d_conv.1} parent=5 // pred_fallthru
      _
    %p155 = scmp.le.s32.totalorder 1, %s9
    %p156 = scmp.lt.s32.totalorder %s9, 5
    %p157 = pnand %p155, %p156
    %p158 = pneg %p157
    // Predicated region
    $region29: #{causal1d_conv.1} parent=5 // pred_check
      _
    $region30: #{causal1d_conv.1} parent=5 // pred_check_branch
      %160 = sbr.rel (%p157) target = $region32
    $region31: #{causal1d_conv.1} parent=5 // pred_region
      %s161 = ssub.s32 %s9, 1
      %p162 = scmp.lt.s32.totalorder %s18, 1
      %s163 = scalar_select %p162, %s18, 1
      %p164 = scmp.lt.s32.totalorder %s19, 1
      %s165 = scalar_select %p164, %s19, 1
      %s166 = smul.addr %s163, 2
      %s167 = sadd.s32 %s165, %s166
      %s168 = smul.addr %s167, 8
      %s169 = scalar_lea.vmem %s0, %s168
      %p170 = pneg %p49
      %p171 = pneg %p46
      %p172 = pneg %p70
      %p173 = pneg %p67
      %p174 = pneg %p91
      %p175 = pneg %p88
      %p176 = pneg %p119
      %p177 = pneg %p116
      %p178 = scmp.lt.s32.totalorder %s18, 1
      %s179 = scalar_select %p178, %s18, 1
      %p180 = scmp.lt.s32.totalorder %s19, 1
      %s181 = scalar_select %p180, %s19, 1
      %s182 = smul.addr %s179, 2
      %s183 = sadd.s32 %s181, %s182
      %s184 = smul.addr %s183, 8
      %s185 = scalar_lea.vmem %s3, %s184
      %p186 = scmp.lt.s32.totalorder %s18, 1
      %s187 = scalar_select %p186, %s18, 1
      %p188 = scmp.lt.s32.totalorder %s19, 1
      %s189 = scalar_select %p188, %s19, 1
      %s190 = smul.addr %s187, 2
      %s191 = sadd.s32 %s189, %s190
      %s192 = smul.addr %s191, 8
      %s193 = scalar_lea.vmem %s0, %s192
      %p194 = scmp.lt.s32.totalorder %s18, 1
      %s195 = scalar_select %p194, %s18, 1
      %p196 = scmp.lt.s32.totalorder %s19, 1
      %s197 = scalar_select %p196, %s19, 1
      %s198 = smul.addr %s195, 2
      %s199 = sadd.s32 %s197, %s198
      %s200 = smul.addr %s199, 8
      %s201 = scalar_lea.vmem %s3, %s200
      %v202 = vld [vmem:[%s193] sm:$0xff]
      %p203 = scmp.eq.s32.totalorder %s19, 0
      // Predicated region
      $region33: #{causal1d_conv.1} parent=31 // pred_check
        %p204 = pneg %p203
      $region34: #{causal1d_conv.1} parent=31 // pred_check_branch
        %206 = sbr.rel (%p204) target = $region36
      $region35: #{causal1d_conv.1} parent=31 // pred_region
        %vm207 = vcmask 27648
        %208 = vst.msk [vmem:[#allocation2] sm:$0xf] %vm207, 0.0
      $region36: #{causal1d_conv.1} parent=31 // pred_fallthru
        _
      %vm209 = vcmask 31744
      %210 = vst.msk [vmem:[#allocation2 + $0x4] sm:$0xff] %vm209, %v202
      %v211 = vld [vmem:[#allocation2] sm:$0xff]
      %v212 = vld [vmem:[#allocation2 + $0x8] sm:$0xf]
      %v213 = vld [vmem:[%s1] sm:$0xf]
      %s214 = scalar_lea.vmem %s1, 4
      %v215 = vld [vmem:[%s214] sm:$0xf]
      %vm218 = vcmask 1045504
      %v219 = vrot.slane %v211, 2
      %v220 = vrot.slane %v212, 2
      %v221 = vsel %vm218, %v219, %v220
      %v222 = vsel %vm209, %v221, 0
      %vm224 = vcmask 1043456
      %v226 = vsel %vm224, %v215, 0
      %228 = vmatprep.subr.mxu0 0.0
      %229 = vmatpush1.msra.mxu0 %v226
      %230 = vmatprep.subr.mxu0 0.0
      %231 = vmatpush1.msra.mxu0 0.0
      %232 = vmatprep.subr.mxu0 0.0
      %233 = vmatpush1.msra.mxu0 0.0
      %234 = vmatprep.subr.mxu0 0.0
      %235 = vmatpush1.msra.mxu0 0.0
      %236 = vmatprep.subr.mxu0 0.0
      %237 = vmatpush1.msra.mxu0 0.0
      %238 = vmatprep.subr.mxu0 0.0
      %239 = vmatpush1.msra.mxu0 0.0
      %240 = vmatprep.subr.mxu0 0.0
      %241 = vmatpush1.msra.mxu0 0.0
      %242 = vmatprep.subr.mxu0 0.0
      %243 = vmatpush1.msra.mxu0 0.0
      %244 = vmatprep.subr.mxu0 0.0
      %245 = vmatpush1.msra.mxu0 0.0
      %246 = vmatprep.subr.mxu0 0.0
      %247 = vmatpush1.msra.mxu0 0.0
      %248 = vmatprep.subr.mxu0 0.0
      %249 = vmatpush1.msra.mxu0 0.0
      %250 = vmatprep.subr.mxu0 0.0
      %251 = vmatpush1.msra.mxu0 0.0
      %252 = vmatprep.subr.mxu0 0.0
      %253 = vmatpush1.msra.mxu0 0.0
      %254 = vmatprep.subr.mxu0 0.0
      %255 = vmatpush1.msra.mxu0 0.0
      %256 = vmatprep.subr.mxu0 0.0
      %257 = vmatpush1.msra.mxu0 0.0
      %258 = vmatprep.subr.mxu0 0.0
      %259 = vmatpush1.msra.mxu0 0.0
      %260 = vmatprep.subr.mxu0 0.0
      %261 = vmatpush1.msra.mxu0 0.0
      %262 = vmatprep.subr.mxu0 0.0
      %263 = vmatpush1.msra.mxu0 0.0
      %264 = vmatprep.subr.mxu0 0.0
      %265 = vmatpush1.msra.mxu0 0.0
      %266 = vmatprep.subr.mxu0 0.0
      %267 = vmatpush1.msra.mxu0 0.0
      %268 = vmatprep.subr.mxu0 0.0
      %269 = vmatpush1.msra.mxu0 0.0
      %270 = vmatprep.subr.mxu0 0.0
      %271 = vmatpush1.msra.mxu0 0.0
      %272 = vmatprep.subr.mxu0 0.0
      %273 = vmatpush1.msra.mxu0 0.0
      %274 = vmatprep.subr.mxu0 0.0
      %275 = vmatpush1.msra.mxu0 0.0
      %276 = vmatprep.subr.mxu0 0.0
      %277 = vmatpush1.msra.mxu0 0.0
      %278 = vmatprep.subr.mxu0 0.0
      %279 = vmatpush1.msra.mxu0 0.0
      %280 = vmatprep.subr.mxu0 0.0
      %281 = vmatpush1.msra.mxu0 0.0
      %282 = vmatprep.subr.mxu0 0.0
      %283 = vmatpush1.msra.mxu0 0.0
      %284 = vmatprep.subr.mxu0 0.0
      %285 = vmatpush1.msra.mxu0 0.0
      %286 = vmatprep.subr.mxu0 0.0
      %287 = vmatpush1.msra.mxu0 0.0
      %288 = vmatprep.subr.mxu0 0.0
      %289 = vmatpush1.msra.mxu0 0.0
      %290 = vmatprep.subr.mxu0 0.0
      %291 = vmatpush1.msra.mxu0 0.0
      %292 = vmatprep.mubr.f32.mxu0 0.0
      %293 = vmatmul.mubr.f32.gmra.mrb[0].mxu0 %v222
      %v294 = vpop.f32.mrb[0].mxu0
      %v295 = vadd.f32 0.0, %v294
      %v296 = vpop.f32.mrb[0].mxu0
      %297 = vdwg.mxu0
      %v298 = vsel %vm209, %v211, 0
      %v301 = vsel %vm224, %v213, 0
      %303 = vmatprep.subr.mxu0 0.0
      %304 = vmatpush1.msra.mxu0 %v301
      %305 = vmatprep.subr.mxu0 0.0
      %306 = vmatpush1.msra.mxu0 0.0
      %307 = vmatprep.subr.mxu0 0.0
      %308 = vmatpush1.msra.mxu0 0.0
      %309 = vmatprep.subr.mxu0 0.0
      %310 = vmatpush1.msra.mxu0 0.0
      %311 = vmatprep.subr.mxu0 0.0
      %312 = vmatpush1.msra.mxu0 0.0
      %313 = vmatprep.subr.mxu0 0.0
      %314 = vmatpush1.msra.mxu0 0.0
      %315 = vmatprep.subr.mxu0 0.0
      %316 = vmatpush1.msra.mxu0 0.0
      %317 = vmatprep.subr.mxu0 0.0
      %318 = vmatpush1.msra.mxu0 0.0
      %319 = vmatprep.subr.mxu0 0.0
      %320 = vmatpush1.msra.mxu0 0.0
      %321 = vmatprep.subr.mxu0 0.0
      %322 = vmatpush1.msra.mxu0 0.0
      %323 = vmatprep.subr.mxu0 0.0
      %324 = vmatpush1.msra.mxu0 0.0
      %325 = vmatprep.subr.mxu0 0.0
      %326 = vmatpush1.msra.mxu0 0.0
      %327 = vmatprep.subr.mxu0 0.0
      %328 = vmatpush1.msra.mxu0 0.0
      %329 = vmatprep.subr.mxu0 0.0
      %330 = vmatpush1.msra.mxu0 0.0
      %331 = vmatprep.subr.mxu0 0.0
      %332 = vmatpush1.msra.mxu0 0.0
      %333 = vmatprep.subr.mxu0 0.0
      %334 = vmatpush1.msra.mxu0 0.0
      %335 = vmatprep.subr.mxu0 0.0
      %336 = vmatpush1.msra.mxu0 0.0
      %337 = vmatprep.subr.mxu0 0.0
      %338 = vmatpush1.msra.mxu0 0.0
      %339 = vmatprep.subr.mxu0 0.0
      %340 = vmatpush1.msra.mxu0 0.0
      %341 = vmatprep.subr.mxu0 0.0
      %342 = vmatpush1.msra.mxu0 0.0
      %343 = vmatprep.subr.mxu0 0.0
      %344 = vmatpush1.msra.mxu0 0.0
      %345 = vmatprep.subr.mxu0 0.0
      %346 = vmatpush1.msra.mxu0 0.0
      %347 = vmatprep.subr.mxu0 0.0
      %348 = vmatpush1.msra.mxu0 0.0
      %349 = vmatprep.subr.mxu0 0.0
      %350 = vmatpush1.msra.mxu0 0.0
      %351 = vmatprep.subr.mxu0 0.0
      %352 = vmatpush1.msra.mxu0 0.0
      %353 = vmatprep.subr.mxu0 0.0
      %354 = vmatpush1.msra.mxu0 0.0
      %355 = vmatprep.subr.mxu0 0.0
      %356 = vmatpush1.msra.mxu0 0.0
      %357 = vmatprep.subr.mxu0 0.0
      %358 = vmatpush1.msra.mxu0 0.0
      %359 = vmatprep.subr.mxu0 0.0
      %360 = vmatpush1.msra.mxu0 0.0
      %361 = vmatprep.subr.mxu0 0.0
      %362 = vmatpush1.msra.mxu0 0.0
      %363 = vmatprep.subr.mxu0 0.0
      %364 = vmatpush1.msra.mxu0 0.0
      %365 = vmatprep.subr.mxu0 0.0
      %366 = vmatpush1.msra.mxu0 0.0
      %367 = vmatprep.mubr.f32.mxu0 0.0
      %368 = vmatmul.mubr.f32.gmra.mrb[0].mxu0 %v298
      %v369 = vpop.f32.mrb[0].mxu0
      %v370 = vadd.f32 %v295, %v369
      %v371 = vpop.f32.mrb[0].mxu0
      %372 = vdwg.mxu0
      %s373 = scalar_lea.vmem %s1, 8
      %v374 = vld [vmem:[%s373] sm:$0xf]
      %v375 = vrot.slane %v211, 4
      %v376 = vrot.slane %v212, 4
      %v377 = vsel %vm224, %v375, %v376
      %v378 = vsel %vm209, %v377, 0
      %v381 = vsel %vm224, %v374, 0
      %383 = vmatprep.subr.mxu0 0.0
      %384 = vmatpush1.msra.mxu0 %v381
      %385 = vmatprep.subr.mxu0 0.0
      %386 = vmatpush1.msra.mxu0 0.0
      %387 = vmatprep.subr.mxu0 0.0
      %388 = vmatpush1.msra.mxu0 0.0
      %389 = vmatprep.subr.mxu0 0.0
      %390 = vmatpush1.msra.mxu0 0.0
      %391 = vmatprep.subr.mxu0 0.0
      %392 = vmatpush1.msra.mxu0 0.0
      %393 = vmatprep.subr.mxu0 0.0
      %394 = vmatpush1.msra.mxu0 0.0
      %395 = vmatprep.subr.mxu0 0.0
      %396 = vmatpush1.msra.mxu0 0.0
      %397 = vmatprep.subr.mxu0 0.0
      %398 = vmatpush1.msra.mxu0 0.0
      %399 = vmatprep.subr.mxu0 0.0
      %400 = vmatpush1.msra.mxu0 0.0
      %401 = vmatprep.subr.mxu0 0.0
      %402 = vmatpush1.msra.mxu0 0.0
      %403 = vmatprep.subr.mxu0 0.0
      %404 = vmatpush1.msra.mxu0 0.0
      %405 = vmatprep.subr.mxu0 0.0
      %406 = vmatpush1.msra.mxu0 0.0
      %407 = vmatprep.subr.mxu0 0.0
      %408 = vmatpush1.msra.mxu0 0.0
      %409 = vmatprep.subr.mxu0 0.0
      %410 = vmatpush1.msra.mxu0 0.0
      %411 = vmatprep.subr.mxu0 0.0
      %412 = vmatpush1.msra.mxu0 0.0
      %413 = vmatprep.subr.mxu0 0.0
      %414 = vmatpush1.msra.mxu0 0.0
      %415 = vmatprep.subr.mxu0 0.0
      %416 = vmatpush1.msra.mxu0 0.0
      %417 = vmatprep.subr.mxu0 0.0
      %418 = vmatpush1.msra.mxu0 0.0
      %419 = vmatprep.subr.mxu0 0.0
      %420 = vmatpush1.msra.mxu0 0.0
      %421 = vmatprep.subr.mxu0 0.0
      %422 = vmatpush1.msra.mxu0 0.0
      %423 = vmatprep.subr.mxu0 0.0
      %424 = vmatpush1.msra.mxu0 0.0
      %425 = vmatprep.subr.mxu0 0.0
      %426 = vmatpush1.msra.mxu0 0.0
      %427 = vmatprep.subr.mxu0 0.0
      %428 = vmatpush1.msra.mxu0 0.0
      %429 = vmatprep.subr.mxu0 0.0
      %430 = vmatpush1.msra.mxu0 0.0
      %431 = vmatprep.subr.mxu0 0.0
      %432 = vmatpush1.msra.mxu0 0.0
      %433 = vmatprep.subr.mxu0 0.0
      %434 = vmatpush1.msra.mxu0 0.0
      %435 = vmatprep.subr.mxu0 0.0
      %436 = vmatpush1.msra.mxu0 0.0
      %437 = vmatprep.subr.mxu0 0.0
      %438 = vmatpush1.msra.mxu0 0.0
      %439 = vmatprep.subr.mxu0 0.0
      %440 = vmatpush1.msra.mxu0 0.0
      %441 = vmatprep.subr.mxu0 0.0
      %442 = vmatpush1.msra.mxu0 0.0
      %443 = vmatprep.subr.mxu0 0.0
      %444 = vmatpush1.msra.mxu0 0.0
      %445 = vmatprep.subr.mxu0 0.0
      %446 = vmatpush1.msra.mxu0 0.0
      %447 = vmatprep.mubr.f32.mxu0 0.0
      %448 = vmatmul.mubr.f32.gmra.mrb[0].mxu0 %v378
      %v449 = vpop.f32.mrb[0].mxu0
      %v450 = vadd.f32 0.0, %v449
      %v451 = vpop.f32.mrb[0].mxu0
      %452 = vdwg.mxu0
      %v453 = vadd.f32 %v370, %v450
      %v454 = vld [vmem:[%s2] sm:$0x1]
      %v456 = vlaneseq
      %v457 = vshrl.u32 %v456, 7
      %v458 = vsub.s32 0, %v457
      %v459 = vrot.slane %v454, %v458
      %v461 = vadd.f32 %v453, %v459
      %462 = vst [vmem:[%s201] sm:$0xff] %v461
      %vm463 = vcmask 27648
      %464 = vst.msk [vmem:[#allocation2] sm:$0xf] %vm463, %v212
      %p465 = scmp.lt.s32.totalorder %s18, 1
      %s466 = scalar_select %p465, %s18, 1
      %p467 = scmp.lt.s32.totalorder %s19, 1
      %s468 = scalar_select %p467, %s19, 1
      %s469 = smul.addr %s466, 2
      %s470 = sadd.s32 %s468, %s469
      %s471 = smul.addr %s470, 8
      %s472 = scalar_lea.vmem %s3, %s471
      // Predicated region
      $region37: #{causal1d_conv.1} parent=31 // pred_check
        %p473 = pneg %p116
      $region38: #{causal1d_conv.1} parent=31 // pred_check_branch
        %475 = sbr.rel (%p473) target = $region40
      $region39: #{causal1d_conv.1} parent=31 // pred_region
        _
      $region40: #{causal1d_conv.1} parent=31 // pred_fallthru
        _
    $region32: #{causal1d_conv.1} parent=5 // pred_fallthru
      _
    %p476 = scmp.le.s32.totalorder 2, %s9
    // Predicated region
    $region41: #{causal1d_conv.1} parent=5 // pred_check
      %p477 = pneg %p476
    $region42: #{causal1d_conv.1} parent=5 // pred_check_branch
      %479 = sbr.rel (%p477) target = $region44
    $region43: #{causal1d_conv.1} parent=5 // pred_region
      %s480 = ssub.s32 %s9, 2
      // Predicated region
      $region45: #{causal1d_conv.1} parent=43 // pred_check
        %p481 = pneg %p122
      $region46: #{causal1d_conv.1} parent=43 // pred_check_branch
        %483 = sbr.rel (%p481) target = $region48
      $region47: #{causal1d_conv.1} parent=43 // pred_region
        %p484 = scmp.lt.s32.totalorder %s20, 1
        %s485 = scalar_select %p484, %s20, 1
        %p486 = scmp.lt.s32.totalorder %s21, 1
        %s487 = scalar_select %p486, %s21, 1
        %s488 = smul.addr %s485, 2
        %s489 = sadd.s32 %s487, %s488
        %s490 = smul.addr %s489, 8
        %s491 = scalar_lea.vmem %s3, %s490
      $region48: #{causal1d_conv.1} parent=43 // pred_fallthru
        _
    $region44: #{causal1d_conv.1} parent=5 // pred_fallthru
      _
  $region6: #{causal1d_conv.1} parent=0 // loop_footer
    %s13 = sadd.s32 1, %s9
  $region7: #{causal1d_conv.1} parent=0 // loop_footer_branch
    %8 = sbr.rel target = $region3
  $region8: #{causal1d_conv.1} parent=0 // loop_exit
    _

</llo_original>
